<compile_context>
chip_gen: v7x
topology: tpu7x:2x2x1
jax: 0.10.0
libtpu: 0.0.40
codegen_flags: <defaults>
</compile_context>

<pallas_src>
import math
import functools

import jax
import jax.numpy as jnp
from jax.experimental import pallas as pl
from jax.experimental.pallas import tpu as pltpu


def _round_up(x, m):
    return ((x + m - 1) // m) * m


def _gcn_kernel(adj_ref, feat_ref, dcol_ref, drow_ref, w_ref, b_ref, o_ref,
                acc_ref, *, self_loop_type, use_bias, apply_w, tm, tk):
    i = pl.program_id(0)          # output-row tile
    k = pl.program_id(1)          # reduction (adjacency-column) tile

    @pl.when(k == 0)
    def _():
        acc_ref[...] = jnp.zeros_like(acc_ref)

    adj = adj_ref[...]

    # Self-loop handling (static python branch, matches torch semantics).
    # Global-index eye mask is identically zero on off-diagonal tiles, so this
    # only modifies values on tiles that actually intersect the diagonal.
    # self_loop_type == 2 (the common case) compiles to no extra work at all.
    if self_loop_type in (0, 1):
        row = jax.lax.broadcasted_iota(jnp.int32, (tm, tk), 0) + i * tm
        col = jax.lax.broadcasted_iota(jnp.int32, (tm, tk), 1) + k * tk
        eye = (row == col).astype(adj.dtype)
        if self_loop_type == 0:
            adj = adj * (1.0 - eye)          # adj * (ones - eye)
        else:
            adj = eye + adj * (1.0 - eye)    # eye + adj * (ones - eye)

    # Column-side D^{-1/2}: scale the feature rows of this k-slab, then one
    # MXU matmul against the (tm, tk) adjacency tile, accumulated in f32.
    feat = feat_ref[...] * dcol_ref[...]                         # [tk, F] * [tk, 1]
    acc_ref[...] += jnp.dot(adj, feat, preferred_element_type=jnp.float32)

    @pl.when(k == pl.num_programs(1) - 1)
    def _():
        y = acc_ref[...] * drow_ref[...]                         # row-side D^{-1/2}
        if apply_w:
            # cheaper association (A' X) W when F_in <= F_out; tiny MXU matmul
            y = jnp.dot(y, w_ref[...], preferred_element_type=jnp.float32)
        if use_bias:
            y = y + b_ref[...]                                   # [1, F_out_pad]
        o_ref[...] = y.astype(o_ref.dtype)


def graph_convolution(x, adj, weight, bias=None, *, self_loop_type=2,
                      tm_target=256, tk_target=512):
    """Pallas GCN layer forward: D^{-1/2} A' D^{-1/2} (X W) (+ b) in float32.

    tm_target / tk_target: row / reduction tile targets (multiples of 128).
    Defaults fit comfortably under the default scoped-VMEM limit on v5e/v6e/v7x;
    grow them (and set CompilerParams(vmem_limit_bytes=...)) for very large N.
    """
    f32 = jnp.float32
    N, F_in = x.shape
    F_out = weight.shape[1]
    use_bias = bias is not None

    x = x if x.dtype == f32 else x.astype(f32)
    adj = adj if adj.dtype == f32 else adj.astype(f32)
    weight = weight if weight.dtype == f32 else weight.astype(f32)

    # ---- degree pre-pass (tiny [N,1] vector) ------------------------------
    # Row sums need every column, which conflicts with streaming adj tiles, so
    # compute them once here; the self-loop diagonal change only shifts the
    # diagonal term, folded in analytically.
    row_sum = jnp.sum(adj, axis=1)
    diag = jnp.diagonal(adj)
    if self_loop_type == 0:
        deg = row_sum - diag
    elif self_loop_type == 1:
        deg = row_sum - diag + 1.0
    else:
        deg = row_sum
    inv_sqrt_deg = (deg ** -0.5).reshape(N, 1).astype(f32)   # matches .pow(-0.5)

    # ---- lane-dense output: pad out_features to a multiple of 128 ---------
    F_out_pad = _round_up(F_out, 128)
    w_pad = weight if F_out_pad == F_out else jnp.pad(
        weight, ((0, 0), (0, F_out_pad - F_out)))
    if use_bias:
        b_pad = jnp.pad(bias.reshape(1, F_out).astype(f32),
                        ((0, 0), (0, F_out_pad - F_out)))
    else:
        b_pad = jnp.zeros((1, F_out_pad), dtype=f32)   # unused; fixed signature

    # ---- matmul association: big N^2 matmul against the narrower operand --
    apply_w = F_in <= F_out
    if apply_w:
        feat = x                                           # stream X, apply W at end
    else:
        feat = jnp.dot(x, w_pad, preferred_element_type=f32)   # stream X @ W
    F_feat = feat.shape[1]

    # ---- tiling: pad N to a multiple of 128; tiles divide padded size -----
    Np = _round_up(N, 128)
    tm = math.gcd(int(tm_target), Np)     # row tile (multiple of 128, divides Np)
    tk = math.gcd(int(tk_target), Np)     # reduction tile (multiple of 128)
    pad_n = Np - N
    if pad_n:
        adj = jnp.pad(adj, ((0, pad_n), (0, pad_n)))
        feat = jnp.pad(feat, ((0, pad_n), (0, 0)))
        # padded rows get inv_sqrt_deg = 0 so they contribute exactly nothing
        inv_sqrt_deg = jnp.pad(inv_sqrt_deg, ((0, pad_n), (0, 0)))

    kernel = functools.partial(
        _gcn_kernel, self_loop_type=self_loop_type, use_bias=use_bias,
        apply_w=apply_w, tm=tm, tk=tk)

    out = pl.pallas_call(
        kernel,
        out_shape=jax.ShapeDtypeStruct((Np, F_out_pad), f32),
        grid=(Np // tm, Np // tk),
        in_specs=[
            pl.BlockSpec((tm, tk), lambda i, k: (i, k)),          # adj tile
            pl.BlockSpec((tk, F_feat), lambda i, k: (k, 0)),      # feature slab
            pl.BlockSpec((tk, 1), lambda i, k: (k, 0)),           # D^-1/2 (cols)
            pl.BlockSpec((tm, 1), lambda i, k: (i, 0)),           # D^-1/2 (rows)
            pl.BlockSpec((F_in, F_out_pad), lambda i, k: (0, 0)),  # weight (resident)
            pl.BlockSpec((1, F_out_pad), lambda i, k: (0, 0)),     # bias   (resident)
        ],
        out_specs=pl.BlockSpec((tm, F_out_pad), lambda i, k: (i, 0)),
        scratch_shapes=[pltpu.VMEM((tm, F_feat), f32)],           # f32 accumulator
        compiler_params=pltpu.CompilerParams(
            dimension_semantics=("parallel", "arbitrary")),
        # NOTE: with larger tm/tk add vmem_limit_bytes=... here (>=25% headroom;
        # remember inputs are double-buffered). Defaults above stay well under
        # the default scoped limit on all generations.
    )(adj, feat, inv_sqrt_deg, inv_sqrt_deg, w_pad, b_pad)

    return out[:N, :F_out]


def _reference(x, adj, weight, bias, self_loop_type):
    """Pure-JAX reference mirroring the torch forward."""
    N = x.shape[0]
    eye = jnp.eye(N, dtype=adj.dtype)
    ones = jnp.ones((N, N), dtype=adj.dtype)
    if self_loop_type == 0:
        adj = adj * (ones - eye)
    elif self_loop_type == 1:
        adj = eye + adj * (ones - eye)
    deg = adj.sum(axis=1)
    normalized_D = jnp.diag(deg ** -0.5)
    normalized_adj = normalized_D @ adj @ normalized_D
    support = x @ weight
    out = normalized_adj @ support
    if bias is not None:
        out = out + bias
    return out


if __name__ == "__main__":
    # Module config (small): in_features=16, out_features=32, N=8 nodes.
    in_features, out_features, N = 16, 32, 8

    key = jax.random.PRNGKey(0)
    kx, kadj, kw, kb = jax.random.split(key, 4)

    # Deterministic parameter init, matching reset_parameters():
    # uniform(-stdv, stdv) with stdv = 1/sqrt(out_features).
    stdv = 1.0 / math.sqrt(out_features)
    weight = jax.random.uniform(kw, (in_features, out_features),
                                minval=-stdv, maxval=stdv, dtype=jnp.float32)
    bias = jax.random.uniform(kb, (out_features,),
                              minval=-stdv, maxval=stdv, dtype=jnp.float32)

    # Node features and a symmetric, strictly-positive adjacency (keeps
    # degrees > 0 so deg^-0.5 is finite, same requirement as the torch code).
    x = jax.random.normal(kx, (N, in_features), dtype=jnp.float32)
    adj_raw = jax.random.uniform(kadj, (N, N), minval=0.1, maxval=1.0,
                                 dtype=jnp.float32)
    adj = 0.5 * (adj_raw + adj_raw.T)

    # Exercise the default path (self_loop_type=2, bias) and the self-loop
    # rewrite path (self_loop_type=1, no bias).
    for slt, b in ((2, bias), (1, None)):
        out = graph_convolution(x, adj, weight, b, self_loop_type=slt)
        out = jax.block_until_ready(out)
        ref = _reference(x, adj, weight, b, slt)
        assert out.shape == (N, out_features), out.shape
        assert jnp.allclose(out, ref, atol=1e-4, rtol=1e-4), (
            f"self_loop_type={slt}: max err {jnp.max(jnp.abs(out - ref))}")

    print("KERNEL_OK")
</pallas_src>

<mosaic_0001>
module attributes {stable_mosaic.version = 11 : i64} {
  func.func @_gcn_kernel(%arg0: i32, %arg1: i32, %arg2: memref<128x128xf32, #tpu.memory_space<vmem>>, %arg3: memref<128x16xf32, #tpu.memory_space<vmem>>, %arg4: memref<128x1xf32, #tpu.memory_space<vmem>>, %arg5: memref<128x1xf32, #tpu.memory_space<vmem>>, %arg6: memref<16x128xf32, #tpu.memory_space<vmem>>, %arg7: memref<1x128xf32, #tpu.memory_space<vmem>>, %arg8: memref<128x128xf32, #tpu.memory_space<vmem>>, %arg9: memref<128x16xf32, #tpu.memory_space<vmem>>) attributes {dimension_semantics = [#tpu.dimension_semantics<parallel>, #tpu.dimension_semantics<arbitrary>], iteration_bounds = array<i64: 1, 1>, scalar_prefetch = 0 : i64, scratch_operands = 1 : i64, tpu.core_type = #tpu.core_type<tc>, window_params = [{transform_indices = @transform_0, window_bounds = array<i64: 128, 128>}, {transform_indices = @transform_1, window_bounds = array<i64: 128, 16>}, {transform_indices = @transform_2, window_bounds = array<i64: 128, 1>}, {transform_indices = @transform_3, window_bounds = array<i64: 128, 1>}, {pipeline_mode = #tpu.pipeline_mode<synchronous>, transform_indices = @transform_4, window_bounds = array<i64: 16, 128>}, {pipeline_mode = #tpu.pipeline_mode<synchronous>, transform_indices = @transform_5, window_bounds = array<i64: 1, 128>}, {transform_indices = @transform_6, window_bounds = array<i64: 128, 128>}]} {
    %c0_i32 = arith.constant 0 : i32
    %0 = arith.cmpi eq, %arg1, %c0_i32 : i32
    %1 = arith.extui %0 : i1 to i32
    %c0_i32_0 = arith.constant 0 : i32
    %2 = arith.cmpi ne, %1, %c0_i32_0 : i32
    scf.if %2 {
      %cst_12 = arith.constant 0.000000e+00 : f32
      %15 = vector.broadcast %cst_12 : f32 to vector<128x16xf32>
      %c0_13 = arith.constant 0 : index
      %c0_14 = arith.constant 0 : index
      %16 = vector.load %arg9[%c0_13, %c0_14] : memref<128x16xf32, #tpu.memory_space<vmem>>, vector<128x16xf32>
      tpu.vector_store %arg9[%c0_13, %c0_14], %15 {strides = array<i32>} : memref<128x16xf32, #tpu.memory_space<vmem>>, vector<128x16xf32>,
    } else {
    }
    %c0 = arith.constant 0 : index
    %c0_1 = arith.constant 0 : index
    %3 = vector.load %arg2[%c0, %c0_1] : memref<128x128xf32, #tpu.memory_space<vmem>>, vector<128x128xf32>
    %c0_2 = arith.constant 0 : index
    %c0_3 = arith.constant 0 : index
    %4 = vector.load %arg3[%c0_2, %c0_3] : memref<128x16xf32, #tpu.memory_space<vmem>>, vector<128x16xf32>
    %c0_4 = arith.constant 0 : index
    %c0_5 = arith.constant 0 : index
    %5 = vector.load %arg4[%c0_4, %c0_5] : memref<128x1xf32, #tpu.memory_space<vmem>>, vector<128x1xf32>
    %6 = vector.broadcast %5 : vector<128x1xf32> to vector<128x16xf32>
    %7 = arith.mulf %4, %6 : vector<128x16xf32>
    %c0_6 = arith.constant 0 : index
    %c0_7 = arith.constant 0 : index
    %8 = vector.load %arg9[%c0_6, %c0_7] : memref<128x16xf32, #tpu.memory_space<vmem>>, vector<128x16xf32>
    %cst = arith.constant dense<0.000000e+00> : vector<128x16xf32>
    %9 = tpu.matmul %3, %7, %cst {dimension_numbers = #tpu.dot_dimension_numbers<[1], [0], [0], [1], [0, 0, 1, 1], [], []>} : vector<128x128xf32>, vector<128x16xf32>, vector<128x16xf32> -> vector<128x16xf32>
    %10 = arith.addf %8, %9 : vector<128x16xf32>
    %c0_8 = arith.constant 0 : index
    %c0_9 = arith.constant 0 : index
    %11 = vector.load %arg9[%c0_8, %c0_9] : memref<128x16xf32, #tpu.memory_space<vmem>>, vector<128x16xf32>
    tpu.vector_store %arg9[%c0_8, %c0_9], %10 {strides = array<i32>} : memref<128x16xf32, #tpu.memory_space<vmem>>, vector<128x16xf32>,
    %c0_i32_10 = arith.constant 0 : i32
    %12 = arith.cmpi eq, %arg1, %c0_i32_10 : i32
    %13 = arith.extui %12 : i1 to i32
    %c0_i32_11 = arith.constant 0 : i32
    %14 = arith.cmpi ne, %13, %c0_i32_11 : i32
    scf.if %14 {
      %c0_12 = arith.constant 0 : index
      %c0_13 = arith.constant 0 : index
      %15 = vector.load %arg9[%c0_12, %c0_13] : memref<128x16xf32, #tpu.memory_space<vmem>>, vector<128x16xf32>
      %c0_14 = arith.constant 0 : index
      %c0_15 = arith.constant 0 : index
      %16 = vector.load %arg5[%c0_14, %c0_15] : memref<128x1xf32, #tpu.memory_space<vmem>>, vector<128x1xf32>
      %17 = vector.broadcast %16 : vector<128x1xf32> to vector<128x16xf32>
      %18 = arith.mulf %15, %17 : vector<128x16xf32>
      %c0_16 = arith.constant 0 : index
      %c0_17 = arith.constant 0 : index
      %19 = vector.load %arg6[%c0_16, %c0_17] : memref<16x128xf32, #tpu.memory_space<vmem>>, vector<16x128xf32>
      %cst_18 = arith.constant dense<0.000000e+00> : vector<128x128xf32>
      %20 = tpu.matmul %18, %19, %cst_18 {dimension_numbers = #tpu.dot_dimension_numbers<[1], [0], [0], [1], [0, 0, 1, 1], [], []>} : vector<128x16xf32>, vector<16x128xf32>, vector<128x128xf32> -> vector<128x128xf32>
      %c0_19 = arith.constant 0 : index
      %c0_20 = arith.constant 0 : index
      %21 = vector.load %arg7[%c0_19, %c0_20] : memref<1x128xf32, #tpu.memory_space<vmem>>, vector<1x128xf32>
      %22 = vector.broadcast %21 : vector<1x128xf32> to vector<128x128xf32>
      %23 = arith.addf %20, %22 : vector<128x128xf32>
      %c0_21 = arith.constant 0 : index
      %c0_22 = arith.constant 0 : index
      %24 = vector.load %arg8[%c0_21, %c0_22] : memref<128x128xf32, #tpu.memory_space<vmem>>, vector<128x128xf32>
      tpu.vector_store %arg8[%c0_21, %c0_22], %23 {strides = array<i32>} : memref<128x128xf32, #tpu.memory_space<vmem>>, vector<128x128xf32>,
    } else {
    }
    return
  }
  func.func @transform_0(%arg0: i32, %arg1: i32) -> (i32, i32) {
    %c0_i32 = arith.constant 0 : i32
    return %arg0, %arg1 : i32, i32
  }
  func.func @transform_1(%arg0: i32, %arg1: i32) -> (i32, i32) {
    %c0_i32 = arith.constant 0 : i32
    %c0_i32_0 = arith.constant 0 : i32
    return %arg1, %c0_i32 : i32, i32
  }
  func.func @transform_2(%arg0: i32, %arg1: i32) -> (i32, i32) {
    %c0_i32 = arith.constant 0 : i32
    %c0_i32_0 = arith.constant 0 : i32
    return %arg1, %c0_i32 : i32, i32
  }
  func.func @transform_3(%arg0: i32, %arg1: i32) -> (i32, i32) {
    %c0_i32 = arith.constant 0 : i32
    %c0_i32_0 = arith.constant 0 : i32
    return %arg0, %c0_i32 : i32, i32
  }
  func.func @transform_4(%arg0: i32, %arg1: i32) -> (i32, i32) {
    %c0_i32 = arith.constant 0 : i32
    %c0_i32_0 = arith.constant 0 : i32
    %c0_i32_1 = arith.constant 0 : i32
    return %c0_i32, %c0_i32_0 : i32, i32
  }
  func.func @transform_5(%arg0: i32, %arg1: i32) -> (i32, i32) {
    %c0_i32 = arith.constant 0 : i32
    %c0_i32_0 = arith.constant 0 : i32
    %c0_i32_1 = arith.constant 0 : i32
    return %c0_i32, %c0_i32_0 : i32, i32
  }
  func.func @transform_6(%arg0: i32, %arg1: i32) -> (i32, i32) {
    %c0_i32 = arith.constant 0 : i32
    %c0_i32_0 = arith.constant 0 : i32
    return %arg0, %c0_i32 : i32, i32
  }
}

</mosaic_0001>

<llo_original>
// kernel: tpu_custom_call.1
$region0: #{tpu_custom_call.1}
  #allocation0 [shape = 'u32[]', space=smem, size = 0x4, offset = 0x4, fixed_abs, tag = 'smem constant byte address 0x4 - core index']
  #allocation1 [shape = 'u32[144,128]{1,0:T(1,128)}', space=vmem, size = 0x12000, scoped, tag = 'internal scratch']
  #allocation2 [shape = 'f32[128,16]{1,0:T(8,128)}', space=vmem, size = 0x10000, scoped, tag = 'scratch operand']
  %s0 = inlined_call_operand.vmem [shape: f32[128,128], index: 0, kind: input, shape index: {}]
  %s1 = inlined_call_operand.vmem [shape: f32[128,16], index: 1, kind: input, shape index: {}]
  %s2 = inlined_call_operand.vmem [shape: f32[128,1], index: 2, kind: input, shape index: {}]
  %s3 = inlined_call_operand.vmem [shape: f32[128,1], index: 3, kind: input, shape index: {}]
  %s4 = inlined_call_operand.vmem [shape: f32[16,128], index: 4, kind: input, shape index: {}]
  %s5 = inlined_call_operand.vmem [shape: f32[1,128], index: 5, kind: input, shape index: {}]
  %s6 = inlined_call_operand.hbm [shape: f32[128,128], index: 6, kind: output, shape index: {}]
  %s7 = sld [smem:[#allocation0]]
  $region42: #{tpu_custom_call.1} parent=0
    _
  %s9 = ssub.s32 1, %s7
  %s10 = scalar_select 0, %s9, %s7
  $region1: #{tpu_custom_call.1} parent=0
    #allocation3 [shape = 'u8[65536]{0}', space=vmem, size = 0x10000, scoped, tag = 'output window, operand 0, single buffered']
    #allocation4 [shape = 's32[1]{0}', space=sflag, size = 0x4, scoped, tag = 'scoped memory for tpu_custom_call.1']
    %11 = vsyncpa [#allocation4], 0
    // Predicated region
    $region2: #{tpu_custom_call.1} parent=1 // pred_check
      _
    $region3: #{tpu_custom_call.1} parent=1 // pred_check_branch
      %13 = sbr.rel (0) target = $region5
    $region4: #{tpu_custom_call.1} parent=1 // pred_region
      _
    $region5: #{tpu_custom_call.1} parent=1 // pred_fallthru
      _
    // Predicated region
    $region6: #{tpu_custom_call.1} parent=1 // pred_check
      _
    $region7: #{tpu_custom_call.1} parent=1 // pred_check_branch
      %15 = sbr.rel (0) target = $region9
    $region8: #{tpu_custom_call.1} parent=1 // pred_region
      _
    $region9: #{tpu_custom_call.1} parent=1 // pred_fallthru
      _
    // Predicated region
    $region10: #{tpu_custom_call.1} parent=1 // pred_check
      _
    $region11: #{tpu_custom_call.1} parent=1 // pred_check_branch
      %17 = sbr.rel (0) target = $region13
    $region12: #{tpu_custom_call.1} parent=1 // pred_region
      _
    $region13: #{tpu_custom_call.1} parent=1 // pred_fallthru
      _
    // Predicated region
    $region14: #{tpu_custom_call.1} parent=1 // pred_check
      _
    $region15: #{tpu_custom_call.1} parent=1 // pred_check_branch
      %19 = sbr.rel (0) target = $region17
    $region16: #{tpu_custom_call.1} parent=1 // pred_region
      _
    $region17: #{tpu_custom_call.1} parent=1 // pred_fallthru
      _
    // Predicated region
    $region18: #{tpu_custom_call.1} parent=1 // pred_check
      _
    $region19: #{tpu_custom_call.1} parent=1 // pred_check_branch
      %21 = sbr.rel (0) target = $region21
    $region20: #{tpu_custom_call.1} parent=1 // pred_region
      _
    $region21: #{tpu_custom_call.1} parent=1 // pred_fallthru
      _
    // Predicated region
    $region22: #{tpu_custom_call.1} parent=1 // pred_check
      _
    $region23: #{tpu_custom_call.1} parent=1 // pred_check_branch
      %23 = sbr.rel (0) target = $region25
    $region24: #{tpu_custom_call.1} parent=1 // pred_region
      _
    $region25: #{tpu_custom_call.1} parent=1 // pred_fallthru
      _
    %p24 = scmp.eq.s32.totalorder 0, 0
    // Predicated region
    $region26: #{tpu_custom_call.1} parent=1 // pred_check
      %p25 = pneg %p24
    $region27: #{tpu_custom_call.1} parent=1 // pred_check_branch
      %27 = sbr.rel (%p25) target = $region29
    $region28: #{tpu_custom_call.1} parent=1 // pred_region
      %vm28 = vcmask 130048
      %29 = vst.msk [vmem:[#allocation2] sm:$0xff] %vm28, 0.0
      %30 = vst.msk [vmem:[#allocation2 + $0x8] sm:$0xff] %vm28, 0.0
      %31 = vst.msk [vmem:[#allocation2 + $0x10] sm:$0xff] %vm28, 0.0
      %32 = vst.msk [vmem:[#allocation2 + $0x18] sm:$0xff] %vm28, 0.0
      %33 = vst.msk [vmem:[#allocation2 + $0x20] sm:$0xff] %vm28, 0.0
      %34 = vst.msk [vmem:[#allocation2 + $0x28] sm:$0xff] %vm28, 0.0
      %35 = vst.msk [vmem:[#allocation2 + $0x30] sm:$0xff] %vm28, 0.0
      %36 = vst.msk [vmem:[#allocation2 + $0x38] sm:$0xff] %vm28, 0.0
      %37 = vst.msk [vmem:[#allocation2 + $0x40] sm:$0xff] %vm28, 0.0
      %38 = vst.msk [vmem:[#allocation2 + $0x48] sm:$0xff] %vm28, 0.0
      %39 = vst.msk [vmem:[#allocation2 + $0x50] sm:$0xff] %vm28, 0.0
      %40 = vst.msk [vmem:[#allocation2 + $0x58] sm:$0xff] %vm28, 0.0
      %41 = vst.msk [vmem:[#allocation2 + $0x60] sm:$0xff] %vm28, 0.0
      %42 = vst.msk [vmem:[#allocation2 + $0x68] sm:$0xff] %vm28, 0.0
      %43 = vst.msk [vmem:[#allocation2 + $0x70] sm:$0xff] %vm28, 0.0
      %44 = vst.msk [vmem:[#allocation2 + $0x78] sm:$0xff] %vm28, 0.0
    $region29: #{tpu_custom_call.1} parent=1 // pred_fallthru
      _
    %v45 = vld [vmem:[%s0] sm:$0xff]
    %v46 = vld [vmem:[%s0 + $0x8] sm:$0xff]
    %v47 = vld [vmem:[%s0 + $0x10] sm:$0xff]
    %v48 = vld [vmem:[%s0 + $0x18] sm:$0xff]
    %v49 = vld [vmem:[%s0 + $0x20] sm:$0xff]
    %v50 = vld [vmem:[%s0 + $0x28] sm:$0xff]
    %v51 = vld [vmem:[%s0 + $0x30] sm:$0xff]
    %v52 = vld [vmem:[%s0 + $0x38] sm:$0xff]
    %v53 = vld [vmem:[%s0 + $0x40] sm:$0xff]
    %v54 = vld [vmem:[%s0 + $0x48] sm:$0xff]
    %v55 = vld [vmem:[%s0 + $0x50] sm:$0xff]
    %v56 = vld [vmem:[%s0 + $0x58] sm:$0xff]
    %v57 = vld [vmem:[%s0 + $0x60] sm:$0xff]
    %v58 = vld [vmem:[%s0 + $0x68] sm:$0xff]
    %v59 = vld [vmem:[%s0 + $0x70] sm:$0xff]
    %v60 = vld [vmem:[%s0 + $0x78] sm:$0xff]
    %v61 = vld [vmem:[%s1] sm:$0xff]
    %v62 = vld [vmem:[%s1 + $0x8] sm:$0xff]
    %v63 = vld [vmem:[%s1 + $0x10] sm:$0xff]
    %v64 = vld [vmem:[%s1 + $0x18] sm:$0xff]
    %v65 = vld [vmem:[%s1 + $0x20] sm:$0xff]
    %v66 = vld [vmem:[%s1 + $0x28] sm:$0xff]
    %v67 = vld [vmem:[%s1 + $0x30] sm:$0xff]
    %v68 = vld [vmem:[%s1 + $0x38] sm:$0xff]
    %v69 = vld [vmem:[%s1 + $0x40] sm:$0xff]
    %v70 = vld [vmem:[%s1 + $0x48] sm:$0xff]
    %v71 = vld [vmem:[%s1 + $0x50] sm:$0xff]
    %v72 = vld [vmem:[%s1 + $0x58] sm:$0xff]
    %v73 = vld [vmem:[%s1 + $0x60] sm:$0xff]
    %v74 = vld [vmem:[%s1 + $0x68] sm:$0xff]
    %v75 = vld [vmem:[%s1 + $0x70] sm:$0xff]
    %v76 = vld [vmem:[%s1 + $0x78] sm:$0xff]
    %v77 = vld [vmem:[%s2] sm:$0xff]
    %v78 = vld [vmem:[%s2 + $0x8] sm:$0xff]
    %v79 = vld [vmem:[%s2 + $0x10] sm:$0xff]
    %v80 = vld [vmem:[%s2 + $0x18] sm:$0xff]
    %v81 = vld [vmem:[%s2 + $0x20] sm:$0xff]
    %v82 = vld [vmem:[%s2 + $0x28] sm:$0xff]
    %v83 = vld [vmem:[%s2 + $0x30] sm:$0xff]
    %v84 = vld [vmem:[%s2 + $0x38] sm:$0xff]
    %v85 = vld [vmem:[%s2 + $0x40] sm:$0xff]
    %v86 = vld [vmem:[%s2 + $0x48] sm:$0xff]
    %v87 = vld [vmem:[%s2 + $0x50] sm:$0xff]
    %v88 = vld [vmem:[%s2 + $0x58] sm:$0xff]
    %v89 = vld [vmem:[%s2 + $0x60] sm:$0xff]
    %v90 = vld [vmem:[%s2 + $0x68] sm:$0xff]
    %v91 = vld [vmem:[%s2 + $0x70] sm:$0xff]
    %v92 = vld [vmem:[%s2 + $0x78] sm:$0xff]
    %94 = vset.pattern.permute.xlu0 0
    %95 = vperm.xlu0 %94, %v77
    %v96 = vpop.permute.xlu0 %95
    %99 = vset.pattern.permute.xlu0 0
    %100 = vperm.xlu0 %99, %v78
    %v101 = vpop.permute.xlu0 %100
    %104 = vset.pattern.permute.xlu0 0
    %105 = vperm.xlu0 %104, %v79
    %v106 = vpop.permute.xlu0 %105
    %109 = vset.pattern.permute.xlu0 0
    %110 = vperm.xlu0 %109, %v80
    %v111 = vpop.permute.xlu0 %110
    %114 = vset.pattern.permute.xlu0 0
    %115 = vperm.xlu0 %114, %v81
    %v116 = vpop.permute.xlu0 %115
    %119 = vset.pattern.permute.xlu0 0
    %120 = vperm.xlu0 %119, %v82
    %v121 = vpop.permute.xlu0 %120
    %124 = vset.pattern.permute.xlu0 0
    %125 = vperm.xlu0 %124, %v83
    %v126 = vpop.permute.xlu0 %125
    %129 = vset.pattern.permute.xlu0 0
    %130 = vperm.xlu0 %129, %v84
    %v131 = vpop.permute.xlu0 %130
    %134 = vset.pattern.permute.xlu0 0
    %135 = vperm.xlu0 %134, %v85
    %v136 = vpop.permute.xlu0 %135
    %139 = vset.pattern.permute.xlu0 0
    %140 = vperm.xlu0 %139, %v86
    %v141 = vpop.permute.xlu0 %140
    %144 = vset.pattern.permute.xlu0 0
    %145 = vperm.xlu0 %144, %v87
    %v146 = vpop.permute.xlu0 %145
    %149 = vset.pattern.permute.xlu0 0
    %150 = vperm.xlu0 %149, %v88
    %v151 = vpop.permute.xlu0 %150
    %154 = vset.pattern.permute.xlu0 0
    %155 = vperm.xlu0 %154, %v89
    %v156 = vpop.permute.xlu0 %155
    %159 = vset.pattern.permute.xlu0 0
    %160 = vperm.xlu0 %159, %v90
    %v161 = vpop.permute.xlu0 %160
    %164 = vset.pattern.permute.xlu0 0
    %165 = vperm.xlu0 %164, %v91
    %v166 = vpop.permute.xlu0 %165
    %169 = vset.pattern.permute.xlu0 0
    %170 = vperm.xlu0 %169, %v92
    %v171 = vpop.permute.xlu0 %170
    %v173 = vmul.f32 %v61, %v96
    %v174 = vmul.f32 %v62, %v101
    %v175 = vmul.f32 %v63, %v106
    %v176 = vmul.f32 %v64, %v111
    %v177 = vmul.f32 %v65, %v116
    %v178 = vmul.f32 %v66, %v121
    %v179 = vmul.f32 %v67, %v126
    %v180 = vmul.f32 %v68, %v131
    %v181 = vmul.f32 %v69, %v136
    %v182 = vmul.f32 %v70, %v141
    %v183 = vmul.f32 %v71, %v146
    %v184 = vmul.f32 %v72, %v151
    %v185 = vmul.f32 %v73, %v156
    %v186 = vmul.f32 %v74, %v161
    %v187 = vmul.f32 %v75, %v166
    %v188 = vmul.f32 %v76, %v171
    %v189 = vld [vmem:[#allocation2] sm:$0xff]
    %v190 = vld [vmem:[#allocation2 + $0x8] sm:$0xff]
    %v191 = vld [vmem:[#allocation2 + $0x10] sm:$0xff]
    %v192 = vld [vmem:[#allocation2 + $0x18] sm:$0xff]
    %v193 = vld [vmem:[#allocation2 + $0x20] sm:$0xff]
    %v194 = vld [vmem:[#allocation2 + $0x28] sm:$0xff]
    %v195 = vld [vmem:[#allocation2 + $0x30] sm:$0xff]
    %v196 = vld [vmem:[#allocation2 + $0x38] sm:$0xff]
    %v197 = vld [vmem:[#allocation2 + $0x40] sm:$0xff]
    %v198 = vld [vmem:[#allocation2 + $0x48] sm:$0xff]
    %v199 = vld [vmem:[#allocation2 + $0x50] sm:$0xff]
    %v200 = vld [vmem:[#allocation2 + $0x58] sm:$0xff]
    %v201 = vld [vmem:[#allocation2 + $0x60] sm:$0xff]
    %v202 = vld [vmem:[#allocation2 + $0x68] sm:$0xff]
    %v203 = vld [vmem:[#allocation2 + $0x70] sm:$0xff]
    %v204 = vld [vmem:[#allocation2 + $0x78] sm:$0xff]
    %205 = vmatprep.subr.mxu0 0.0
    %206 = vmatpush1.msra.mxu0 %v173
    %207 = vmatprep.subr.mxu0 0.0
    %208 = vmatpush1.msra.mxu0 %v174
    %209 = vmatprep.subr.mxu0 0.0
    %210 = vmatpush1.msra.mxu0 %v175
    %211 = vmatprep.subr.mxu0 0.0
    %212 = vmatpush1.msra.mxu0 %v176
    %213 = vmatprep.subr.mxu0 0.0
    %214 = vmatpush1.msra.mxu0 %v177
    %215 = vmatprep.subr.mxu0 0.0
    %216 = vmatpush1.msra.mxu0 %v178
    %217 = vmatprep.subr.mxu0 0.0
    %218 = vmatpush1.msra.mxu0 %v179
    %219 = vmatprep.subr.mxu0 0.0
    %220 = vmatpush1.msra.mxu0 %v180
    %221 = vmatprep.subr.mxu0 0.0
    %222 = vmatpush1.msra.mxu0 %v181
    %223 = vmatprep.subr.mxu0 0.0
    %224 = vmatpush1.msra.mxu0 %v182
    %225 = vmatprep.subr.mxu0 0.0
    %226 = vmatpush1.msra.mxu0 %v183
    %227 = vmatprep.subr.mxu0 0.0
    %228 = vmatpush1.msra.mxu0 %v184
    %229 = vmatprep.subr.mxu0 0.0
    %230 = vmatpush1.msra.mxu0 %v185
    %231 = vmatprep.subr.mxu0 0.0
    %232 = vmatpush1.msra.mxu0 %v186
    %233 = vmatprep.subr.mxu0 0.0
    %234 = vmatpush1.msra.mxu0 %v187
    %235 = vmatprep.subr.mxu0 0.0
    %236 = vmatpush1.msra.mxu0 %v188
    %237 = vmatprep.subr.mxu0 0.0
    %238 = vmatpush1.msra.mxu0 0.0
    %239 = vmatprep.subr.mxu0 0.0
    %240 = vmatpush1.msra.mxu0 0.0
    %241 = vmatprep.subr.mxu0 0.0
    %242 = vmatpush1.msra.mxu0 0.0
    %243 = vmatprep.subr.mxu0 0.0
    %244 = vmatpush1.msra.mxu0 0.0
    %245 = vmatprep.subr.mxu0 0.0
    %246 = vmatpush1.msra.mxu0 0.0
    %247 = vmatprep.subr.mxu0 0.0
    %248 = vmatpush1.msra.mxu0 0.0
    %249 = vmatprep.subr.mxu0 0.0
    %250 = vmatpush1.msra.mxu0 0.0
    %251 = vmatprep.subr.mxu0 0.0
    %252 = vmatpush1.msra.mxu0 0.0
    %253 = vmatprep.subr.mxu0 0.0
    %254 = vmatpush1.msra.mxu0 0.0
    %255 = vmatprep.subr.mxu0 0.0
    %256 = vmatpush1.msra.mxu0 0.0
    %257 = vmatprep.subr.mxu0 0.0
    %258 = vmatpush1.msra.mxu0 0.0
    %259 = vmatprep.subr.mxu0 0.0
    %260 = vmatpush1.msra.mxu0 0.0
    %261 = vmatprep.subr.mxu0 0.0
    %262 = vmatpush1.msra.mxu0 0.0
    %263 = vmatprep.subr.mxu0 0.0
    %264 = vmatpush1.msra.mxu0 0.0
    %265 = vmatprep.subr.mxu0 0.0
    %266 = vmatpush1.msra.mxu0 0.0
    %267 = vmatprep.subr.mxu0 0.0
    %268 = vmatpush1.msra.mxu0 0.0
    %269 = vmatprep.mubr.f32.mxu0 0.0
    %270 = vmatmul.mubr.f32.gmra.mrb[0].mxu0 %v45
    %v271 = vpop.f32.mrb[0].mxu0
    %v272 = vadd.f32 0.0, %v271
    %v273 = vpop.f32.mrb[0].mxu0
    %274 = vmatprep.mubr.f32.mxu0 0.0
    %275 = vmatmul.mubr.f32.gmra.mrb[0].mxu0 %v46
    %v276 = vpop.f32.mrb[0].mxu0
    %v277 = vadd.f32 0.0, %v276
    %v278 = vpop.f32.mrb[0].mxu0
    %279 = vmatprep.mubr.f32.mxu0 0.0
    %280 = vmatmul.mubr.f32.gmra.mrb[0].mxu0 %v47
    %v281 = vpop.f32.mrb[0].mxu0
    %v282 = vadd.f32 0.0, %v281
    %v283 = vpop.f32.mrb[0].mxu0
    %284 = vmatprep.mubr.f32.mxu0 0.0
    %285 = vmatmul.mubr.f32.gmra.mrb[0].mxu0 %v48
    %v286 = vpop.f32.mrb[0].mxu0
    %v287 = vadd.f32 0.0, %v286
    %v288 = vpop.f32.mrb[0].mxu0
    %289 = vmatprep.mubr.f32.mxu0 0.0
    %290 = vmatmul.mubr.f32.gmra.mrb[0].mxu0 %v49
    %v291 = vpop.f32.mrb[0].mxu0
    %v292 = vadd.f32 0.0, %v291
    %v293 = vpop.f32.mrb[0].mxu0
    %294 = vmatprep.mubr.f32.mxu0 0.0
    %295 = vmatmul.mubr.f32.gmra.mrb[0].mxu0 %v50
    %v296 = vpop.f32.mrb[0].mxu0
    %v297 = vadd.f32 0.0, %v296
    %v298 = vpop.f32.mrb[0].mxu0
    %299 = vmatprep.mubr.f32.mxu0 0.0
    %300 = vmatmul.mubr.f32.gmra.mrb[0].mxu0 %v51
    %v301 = vpop.f32.mrb[0].mxu0
    %v302 = vadd.f32 0.0, %v301
    %v303 = vpop.f32.mrb[0].mxu0
    %304 = vmatprep.mubr.f32.mxu0 0.0
    %305 = vmatmul.mubr.f32.gmra.mrb[0].mxu0 %v52
    %v306 = vpop.f32.mrb[0].mxu0
    %v307 = vadd.f32 0.0, %v306
    %v308 = vpop.f32.mrb[0].mxu0
    %309 = vmatprep.mubr.f32.mxu0 0.0
    %310 = vmatmul.mubr.f32.gmra.mrb[0].mxu0 %v53
    %v311 = vpop.f32.mrb[0].mxu0
    %v312 = vadd.f32 0.0, %v311
    %v313 = vpop.f32.mrb[0].mxu0
    %314 = vmatprep.mubr.f32.mxu0 0.0
    %315 = vmatmul.mubr.f32.gmra.mrb[0].mxu0 %v54
    %v316 = vpop.f32.mrb[0].mxu0
    %v317 = vadd.f32 0.0, %v316
    %v318 = vpop.f32.mrb[0].mxu0
    %319 = vmatprep.mubr.f32.mxu0 0.0
    %320 = vmatmul.mubr.f32.gmra.mrb[0].mxu0 %v55
    %v321 = vpop.f32.mrb[0].mxu0
    %v322 = vadd.f32 0.0, %v321
    %v323 = vpop.f32.mrb[0].mxu0
    %324 = vmatprep.mubr.f32.mxu0 0.0
    %325 = vmatmul.mubr.f32.gmra.mrb[0].mxu0 %v56
    %v326 = vpop.f32.mrb[0].mxu0
    %v327 = vadd.f32 0.0, %v326
    %v328 = vpop.f32.mrb[0].mxu0
    %329 = vmatprep.mubr.f32.mxu0 0.0
    %330 = vmatmul.mubr.f32.gmra.mrb[0].mxu0 %v57
    %v331 = vpop.f32.mrb[0].mxu0
    %v332 = vadd.f32 0.0, %v331
    %v333 = vpop.f32.mrb[0].mxu0
    %334 = vmatprep.mubr.f32.mxu0 0.0
    %335 = vmatmul.mubr.f32.gmra.mrb[0].mxu0 %v58
    %v336 = vpop.f32.mrb[0].mxu0
    %v337 = vadd.f32 0.0, %v336
    %v338 = vpop.f32.mrb[0].mxu0
    %339 = vmatprep.mubr.f32.mxu0 0.0
    %340 = vmatmul.mubr.f32.gmra.mrb[0].mxu0 %v59
    %v341 = vpop.f32.mrb[0].mxu0
    %v342 = vadd.f32 0.0, %v341
    %v343 = vpop.f32.mrb[0].mxu0
    %344 = vmatprep.mubr.f32.mxu0 0.0
    %345 = vmatmul.mubr.f32.gmra.mrb[0].mxu0 %v60
    %v346 = vpop.f32.mrb[0].mxu0
    %v347 = vadd.f32 0.0, %v346
    %v348 = vpop.f32.mrb[0].mxu0
    %349 = vdwg.mxu0
    %v350 = vadd.f32 %v189, %v272
    %v351 = vadd.f32 %v190, %v277
    %v352 = vadd.f32 %v191, %v282
    %v353 = vadd.f32 %v192, %v287
    %v354 = vadd.f32 %v193, %v292
    %v355 = vadd.f32 %v194, %v297
    %v356 = vadd.f32 %v195, %v302
    %v357 = vadd.f32 %v196, %v307
    %v358 = vadd.f32 %v197, %v312
    %v359 = vadd.f32 %v198, %v317
    %v360 = vadd.f32 %v199, %v322
    %v361 = vadd.f32 %v200, %v327
    %v362 = vadd.f32 %v201, %v332
    %v363 = vadd.f32 %v202, %v337
    %v364 = vadd.f32 %v203, %v342
    %v365 = vadd.f32 %v204, %v347
    %vm366 = vcmask 130048
    %367 = vst.msk [vmem:[#allocation2] sm:$0xff] %vm366, %v350
    %368 = vst.msk [vmem:[#allocation2 + $0x8] sm:$0xff] %vm366, %v351
    %369 = vst.msk [vmem:[#allocation2 + $0x10] sm:$0xff] %vm366, %v352
    %370 = vst.msk [vmem:[#allocation2 + $0x18] sm:$0xff] %vm366, %v353
    %371 = vst.msk [vmem:[#allocation2 + $0x20] sm:$0xff] %vm366, %v354
    %372 = vst.msk [vmem:[#allocation2 + $0x28] sm:$0xff] %vm366, %v355
    %373 = vst.msk [vmem:[#allocation2 + $0x30] sm:$0xff] %vm366, %v356
    %374 = vst.msk [vmem:[#allocation2 + $0x38] sm:$0xff] %vm366, %v357
    %375 = vst.msk [vmem:[#allocation2 + $0x40] sm:$0xff] %vm366, %v358
    %376 = vst.msk [vmem:[#allocation2 + $0x48] sm:$0xff] %vm366, %v359
    %377 = vst.msk [vmem:[#allocation2 + $0x50] sm:$0xff] %vm366, %v360
    %378 = vst.msk [vmem:[#allocation2 + $0x58] sm:$0xff] %vm366, %v361
    %379 = vst.msk [vmem:[#allocation2 + $0x60] sm:$0xff] %vm366, %v362
    %380 = vst.msk [vmem:[#allocation2 + $0x68] sm:$0xff] %vm366, %v363
    %381 = vst.msk [vmem:[#allocation2 + $0x70] sm:$0xff] %vm366, %v364
    %382 = vst.msk [vmem:[#allocation2 + $0x78] sm:$0xff] %vm366, %v365
    // Predicated region
    $region30: #{tpu_custom_call.1} parent=1 // pred_check
      %p383 = pneg %p24
    $region31: #{tpu_custom_call.1} parent=1 // pred_check_branch
      %385 = sbr.rel (%p383) target = $region33
    $region32: #{tpu_custom_call.1} parent=1 // pred_region
      %v386 = vld [vmem:[#allocation2] sm:$0xff]
      %v387 = vld [vmem:[#allocation2 + $0x8] sm:$0xff]
      %v388 = vld [vmem:[#allocation2 + $0x10] sm:$0xff]
      %v389 = vld [vmem:[#allocation2 + $0x18] sm:$0xff]
      %v390 = vld [vmem:[#allocation2 + $0x20] sm:$0xff]
      %v391 = vld [vmem:[#allocation2 + $0x28] sm:$0xff]
      %v392 = vld [vmem:[#allocation2 + $0x30] sm:$0xff]
      %v393 = vld [vmem:[#allocation2 + $0x38] sm:$0xff]
      %v394 = vld [vmem:[#allocation2 + $0x40] sm:$0xff]
      %v395 = vld [vmem:[#allocation2 + $0x48] sm:$0xff]
      %v396 = vld [vmem:[#allocation2 + $0x50] sm:$0xff]
      %v397 = vld [vmem:[#allocation2 + $0x58] sm:$0xff]
      %v398 = vld [vmem:[#allocation2 + $0x60] sm:$0xff]
      %v399 = vld [vmem:[#allocation2 + $0x68] sm:$0xff]
      %v400 = vld [vmem:[#allocation2 + $0x70] sm:$0xff]
      %v401 = vld [vmem:[#allocation2 + $0x78] sm:$0xff]
      %v402 = vld [vmem:[%s3] sm:$0xff]
      %v403 = vld [vmem:[%s3 + $0x8] sm:$0xff]
      %v404 = vld [vmem:[%s3 + $0x10] sm:$0xff]
      %v405 = vld [vmem:[%s3 + $0x18] sm:$0xff]
      %v406 = vld [vmem:[%s3 + $0x20] sm:$0xff]
      %v407 = vld [vmem:[%s3 + $0x28] sm:$0xff]
      %v408 = vld [vmem:[%s3 + $0x30] sm:$0xff]
      %v409 = vld [vmem:[%s3 + $0x38] sm:$0xff]
      %v410 = vld [vmem:[%s3 + $0x40] sm:$0xff]
      %v411 = vld [vmem:[%s3 + $0x48] sm:$0xff]
      %v412 = vld [vmem:[%s3 + $0x50] sm:$0xff]
      %v413 = vld [vmem:[%s3 + $0x58] sm:$0xff]
      %v414 = vld [vmem:[%s3 + $0x60] sm:$0xff]
      %v415 = vld [vmem:[%s3 + $0x68] sm:$0xff]
      %v416 = vld [vmem:[%s3 + $0x70] sm:$0xff]
      %v417 = vld [vmem:[%s3 + $0x78] sm:$0xff]
      %419 = vset.pattern.permute.xlu0 0
      %420 = vperm.xlu0 %419, %v402
      %v421 = vpop.permute.xlu0 %420
      %424 = vset.pattern.permute.xlu0 0
      %425 = vperm.xlu0 %424, %v403
      %v426 = vpop.permute.xlu0 %425
      %429 = vset.pattern.permute.xlu0 0
      %430 = vperm.xlu0 %429, %v404
      %v431 = vpop.permute.xlu0 %430
      %434 = vset.pattern.permute.xlu0 0
      %435 = vperm.xlu0 %434, %v405
      %v436 = vpop.permute.xlu0 %435
      %439 = vset.pattern.permute.xlu0 0
      %440 = vperm.xlu0 %439, %v406
      %v441 = vpop.permute.xlu0 %440
      %444 = vset.pattern.permute.xlu0 0
      %445 = vperm.xlu0 %444, %v407
      %v446 = vpop.permute.xlu0 %445
      %449 = vset.pattern.permute.xlu0 0
      %450 = vperm.xlu0 %449, %v408
      %v451 = vpop.permute.xlu0 %450
      %454 = vset.pattern.permute.xlu0 0
      %455 = vperm.xlu0 %454, %v409
      %v456 = vpop.permute.xlu0 %455
      %459 = vset.pattern.permute.xlu0 0
      %460 = vperm.xlu0 %459, %v410
      %v461 = vpop.permute.xlu0 %460
      %464 = vset.pattern.permute.xlu0 0
      %465 = vperm.xlu0 %464, %v411
      %v466 = vpop.permute.xlu0 %465
      %469 = vset.pattern.permute.xlu0 0
      %470 = vperm.xlu0 %469, %v412
      %v471 = vpop.permute.xlu0 %470
      %474 = vset.pattern.permute.xlu0 0
      %475 = vperm.xlu0 %474, %v413
      %v476 = vpop.permute.xlu0 %475
      %479 = vset.pattern.permute.xlu0 0
      %480 = vperm.xlu0 %479, %v414
      %v481 = vpop.permute.xlu0 %480
      %484 = vset.pattern.permute.xlu0 0
      %485 = vperm.xlu0 %484, %v415
      %v486 = vpop.permute.xlu0 %485
      %489 = vset.pattern.permute.xlu0 0
      %490 = vperm.xlu0 %489, %v416
      %v491 = vpop.permute.xlu0 %490
      %494 = vset.pattern.permute.xlu0 0
      %495 = vperm.xlu0 %494, %v417
      %v496 = vpop.permute.xlu0 %495
      %v498 = vmul.f32 %v386, %v421
      %v499 = vmul.f32 %v387, %v426
      %v500 = vmul.f32 %v388, %v431
      %v501 = vmul.f32 %v389, %v436
      %v502 = vmul.f32 %v390, %v441
      %v503 = vmul.f32 %v391, %v446
      %v504 = vmul.f32 %v392, %v451
      %v505 = vmul.f32 %v393, %v456
      %v506 = vmul.f32 %v394, %v461
      %v507 = vmul.f32 %v395, %v466
      %v508 = vmul.f32 %v396, %v471
      %v509 = vmul.f32 %v397, %v476
      %v510 = vmul.f32 %v398, %v481
      %v511 = vmul.f32 %v399, %v486
      %v512 = vmul.f32 %v400, %v491
      %v513 = vmul.f32 %v401, %v496
      %v514 = vld [vmem:[%s4] sm:$0xff]
      %v515 = vld [vmem:[%s4 + $0x8] sm:$0xff]
      %v516 = vld [vmem:[%s5] sm:$0x1]
      %v518 = vlaneseq
      %v519 = vshrl.u32 %v518, 7
      %v520 = vsub.s32 0, %v519
      %v521 = vrot.slane %v516, %v520
      %v524 = vsel %vm366, %v498, 0
      %v527 = vsel %vm366, %v499, 0
      %v530 = vsel %vm366, %v500, 0
      %v533 = vsel %vm366, %v501, 0
      %v536 = vsel %vm366, %v502, 0
      %v539 = vsel %vm366, %v503, 0
      %v542 = vsel %vm366, %v504, 0
      %v545 = vsel %vm366, %v505, 0
      %v548 = vsel %vm366, %v506, 0
      %v551 = vsel %vm366, %v507, 0
      %v554 = vsel %vm366, %v508, 0
      %v557 = vsel %vm366, %v509, 0
      %v560 = vsel %vm366, %v510, 0
      %v563 = vsel %vm366, %v511, 0
      %v566 = vsel %vm366, %v512, 0
      %v569 = vsel %vm366, %v513, 0
      %571 = vmatprep.subr.mxu0 0.0
      %572 = vmatpush1.msra.mxu0 %v514
      %573 = vmatprep.subr.mxu0 0.0
      %574 = vmatpush1.msra.mxu0 %v515
      %575 = vmatprep.subr.mxu0 0.0
      %576 = vmatpush1.msra.mxu0 0.0
      %577 = vmatprep.subr.mxu0 0.0
      %578 = vmatpush1.msra.mxu0 0.0
      %579 = vmatprep.subr.mxu0 0.0
      %580 = vmatpush1.msra.mxu0 0.0
      %581 = vmatprep.subr.mxu0 0.0
      %582 = vmatpush1.msra.mxu0 0.0
      %583 = vmatprep.subr.mxu0 0.0
      %584 = vmatpush1.msra.mxu0 0.0
      %585 = vmatprep.subr.mxu0 0.0
      %586 = vmatpush1.msra.mxu0 0.0
      %587 = vmatprep.subr.mxu0 0.0
      %588 = vmatpush1.msra.mxu0 0.0
      %589 = vmatprep.subr.mxu0 0.0
      %590 = vmatpush1.msra.mxu0 0.0
      %591 = vmatprep.subr.mxu0 0.0
      %592 = vmatpush1.msra.mxu0 0.0
      %593 = vmatprep.subr.mxu0 0.0
      %594 = vmatpush1.msra.mxu0 0.0
      %595 = vmatprep.subr.mxu0 0.0
      %596 = vmatpush1.msra.mxu0 0.0
      %597 = vmatprep.subr.mxu0 0.0
      %598 = vmatpush1.msra.mxu0 0.0
      %599 = vmatprep.subr.mxu0 0.0
      %600 = vmatpush1.msra.mxu0 0.0
      %601 = vmatprep.subr.mxu0 0.0
      %602 = vmatpush1.msra.mxu0 0.0
      %603 = vmatprep.subr.mxu0 0.0
      %604 = vmatpush1.msra.mxu0 0.0
      %605 = vmatprep.subr.mxu0 0.0
      %606 = vmatpush1.msra.mxu0 0.0
      %607 = vmatprep.subr.mxu0 0.0
      %608 = vmatpush1.msra.mxu0 0.0
      %609 = vmatprep.subr.mxu0 0.0
      %610 = vmatpush1.msra.mxu0 0.0
      %611 = vmatprep.subr.mxu0 0.0
      %612 = vmatpush1.msra.mxu0 0.0
      %613 = vmatprep.subr.mxu0 0.0
      %614 = vmatpush1.msra.mxu0 0.0
      %615 = vmatprep.subr.mxu0 0.0
      %616 = vmatpush1.msra.mxu0 0.0
      %617 = vmatprep.subr.mxu0 0.0
      %618 = vmatpush1.msra.mxu0 0.0
      %619 = vmatprep.subr.mxu0 0.0
      %620 = vmatpush1.msra.mxu0 0.0
      %621 = vmatprep.subr.mxu0 0.0
      %622 = vmatpush1.msra.mxu0 0.0
      %623 = vmatprep.subr.mxu0 0.0
      %624 = vmatpush1.msra.mxu0 0.0
      %625 = vmatprep.subr.mxu0 0.0
      %626 = vmatpush1.msra.mxu0 0.0
      %627 = vmatprep.subr.mxu0 0.0
      %628 = vmatpush1.msra.mxu0 0.0
      %629 = vmatprep.subr.mxu0 0.0
      %630 = vmatpush1.msra.mxu0 0.0
      %631 = vmatprep.subr.mxu0 0.0
      %632 = vmatpush1.msra.mxu0 0.0
      %633 = vmatprep.subr.mxu0 0.0
      %634 = vmatpush1.msra.mxu0 0.0
      %635 = vmatprep.mubr.f32.mxu0 0.0
      %636 = vmatmul.mubr.f32.gmra.mrb[0].mxu0 %v524
      %v637 = vpop.f32.mrb[0].mxu0
      %v638 = vadd.f32 %v521, %v637
      %v639 = vpop.f32.mrb[0].mxu0
      %640 = vmatprep.mubr.f32.mxu0 0.0
      %641 = vmatmul.mubr.f32.gmra.mrb[0].mxu0 %v527
      %v642 = vpop.f32.mrb[0].mxu0
      %v643 = vadd.f32 %v521, %v642
      %v644 = vpop.f32.mrb[0].mxu0
      %645 = vmatprep.mubr.f32.mxu0 0.0
      %646 = vmatmul.mubr.f32.gmra.mrb[0].mxu0 %v530
      %v647 = vpop.f32.mrb[0].mxu0
      %v648 = vadd.f32 %v521, %v647
      %v649 = vpop.f32.mrb[0].mxu0
      %650 = vmatprep.mubr.f32.mxu0 0.0
      %651 = vmatmul.mubr.f32.gmra.mrb[0].mxu0 %v533
      %v652 = vpop.f32.mrb[0].mxu0
      %v653 = vadd.f32 %v521, %v652
      %v654 = vpop.f32.mrb[0].mxu0
      %655 = vmatprep.mubr.f32.mxu0 0.0
      %656 = vmatmul.mubr.f32.gmra.mrb[0].mxu0 %v536
      %v657 = vpop.f32.mrb[0].mxu0
      %v658 = vadd.f32 %v521, %v657
      %v659 = vpop.f32.mrb[0].mxu0
      %660 = vmatprep.mubr.f32.mxu0 0.0
      %661 = vmatmul.mubr.f32.gmra.mrb[0].mxu0 %v539
      %v662 = vpop.f32.mrb[0].mxu0
      %v663 = vadd.f32 %v521, %v662
      %v664 = vpop.f32.mrb[0].mxu0
      %665 = vmatprep.mubr.f32.mxu0 0.0
      %666 = vmatmul.mubr.f32.gmra.mrb[0].mxu0 %v542
      %v667 = vpop.f32.mrb[0].mxu0
      %v668 = vadd.f32 %v521, %v667
      %v669 = vpop.f32.mrb[0].mxu0
      %670 = vmatprep.mubr.f32.mxu0 0.0
      %671 = vmatmul.mubr.f32.gmra.mrb[0].mxu0 %v545
      %v672 = vpop.f32.mrb[0].mxu0
      %v673 = vadd.f32 %v521, %v672
      %v674 = vpop.f32.mrb[0].mxu0
      %675 = vmatprep.mubr.f32.mxu0 0.0
      %676 = vmatmul.mubr.f32.gmra.mrb[0].mxu0 %v548
      %v677 = vpop.f32.mrb[0].mxu0
      %v678 = vadd.f32 %v521, %v677
      %v679 = vpop.f32.mrb[0].mxu0
      %680 = vmatprep.mubr.f32.mxu0 0.0
      %681 = vmatmul.mubr.f32.gmra.mrb[0].mxu0 %v551
      %v682 = vpop.f32.mrb[0].mxu0
      %v683 = vadd.f32 %v521, %v682
      %v684 = vpop.f32.mrb[0].mxu0
      %685 = vmatprep.mubr.f32.mxu0 0.0
      %686 = vmatmul.mubr.f32.gmra.mrb[0].mxu0 %v554
      %v687 = vpop.f32.mrb[0].mxu0
      %v688 = vadd.f32 %v521, %v687
      %v689 = vpop.f32.mrb[0].mxu0
      %690 = vmatprep.mubr.f32.mxu0 0.0
      %691 = vmatmul.mubr.f32.gmra.mrb[0].mxu0 %v557
      %v692 = vpop.f32.mrb[0].mxu0
      %v693 = vadd.f32 %v521, %v692
      %v694 = vpop.f32.mrb[0].mxu0
      %695 = vmatprep.mubr.f32.mxu0 0.0
      %696 = vmatmul.mubr.f32.gmra.mrb[0].mxu0 %v560
      %v697 = vpop.f32.mrb[0].mxu0
      %v698 = vadd.f32 %v521, %v697
      %v699 = vpop.f32.mrb[0].mxu0
      %700 = vmatprep.mubr.f32.mxu0 0.0
      %701 = vmatmul.mubr.f32.gmra.mrb[0].mxu0 %v563
      %v702 = vpop.f32.mrb[0].mxu0
      %v703 = vadd.f32 %v521, %v702
      %v704 = vpop.f32.mrb[0].mxu0
      %705 = vmatprep.mubr.f32.mxu0 0.0
      %706 = vmatmul.mubr.f32.gmra.mrb[0].mxu0 %v566
      %v707 = vpop.f32.mrb[0].mxu0
      %v708 = vadd.f32 %v521, %v707
      %v709 = vpop.f32.mrb[0].mxu0
      %710 = vmatprep.mubr.f32.mxu0 0.0
      %711 = vmatmul.mubr.f32.gmra.mrb[0].mxu0 %v569
      %v712 = vpop.f32.mrb[0].mxu0
      %v713 = vadd.f32 %v521, %v712
      %v714 = vpop.f32.mrb[0].mxu0
      %715 = vdwg.mxu0
      %716 = vst [vmem:[#allocation3] sm:$0xff] %v638
      %717 = vst [vmem:[#allocation3 + $0x8] sm:$0xff] %v643
      %718 = vst [vmem:[#allocation3 + $0x10] sm:$0xff] %v648
      %719 = vst [vmem:[#allocation3 + $0x18] sm:$0xff] %v653
      %720 = vst [vmem:[#allocation3 + $0x20] sm:$0xff] %v658
      %721 = vst [vmem:[#allocation3 + $0x28] sm:$0xff] %v663
      %722 = vst [vmem:[#allocation3 + $0x30] sm:$0xff] %v668
      %723 = vst [vmem:[#allocation3 + $0x38] sm:$0xff] %v673
      %724 = vst [vmem:[#allocation3 + $0x40] sm:$0xff] %v678
      %725 = vst [vmem:[#allocation3 + $0x48] sm:$0xff] %v683
      %726 = vst [vmem:[#allocation3 + $0x50] sm:$0xff] %v688
      %727 = vst [vmem:[#allocation3 + $0x58] sm:$0xff] %v693
      %728 = vst [vmem:[#allocation3 + $0x60] sm:$0xff] %v698
      %729 = vst [vmem:[#allocation3 + $0x68] sm:$0xff] %v703
      %730 = vst [vmem:[#allocation3 + $0x70] sm:$0xff] %v708
      %731 = vst [vmem:[#allocation3 + $0x78] sm:$0xff] %v713
    $region33: #{tpu_custom_call.1} parent=1 // pred_fallthru
      _
    // Predicated region
    $region34: #{tpu_custom_call.1} parent=1 // pred_check
      _
    $region35: #{tpu_custom_call.1} parent=1 // pred_check_branch
      %733 = sbr.rel (0) target = $region37
    $region36: #{tpu_custom_call.1} parent=1 // pred_region
      %s735 = ssub.s32 2048, 2048
      %736 = vsyncadd [#allocation4], %s735
      %s737 = sshll.u32 [#allocation3], 4
      %s738 = int_to_ptr.vmem [resolvable:$true] %s737
      %743 = dma.vmem_to_hbm [thread:$0]  %s738, 2048, %s6, [#allocation4], 128, 128, 8
    $region37: #{tpu_custom_call.1} parent=1 // pred_fallthru
      _
    // Predicated region
    $region38: #{tpu_custom_call.1} parent=1 // pred_check
      _
    $region39: #{tpu_custom_call.1} parent=1 // pred_check_branch
      %745 = sbr.rel (0) target = $region41
    $region40: #{tpu_custom_call.1} parent=1 // pred_region
      %746 = dma.done [#allocation4], 2048
    $region41: #{tpu_custom_call.1} parent=1 // pred_fallthru
      _
    %747 = vsyncpa [#allocation4], 1

</llo_original>
